<compile_context>
chip_gen: v7x
topology: tpu7x:2x2x1
jax: 0.10.0
libtpu: 0.0.40
codegen_flags: <defaults>
</compile_context>

<pallas_src>
import jax
import jax.numpy as jnp
from jax.experimental import pallas as pl
from jax.experimental.pallas import tpu as pltpu


def _round_up(x, m):
    return ((x + m - 1) // m) * m


def _vmem_limit_bytes():
    """Scoped-VMEM limit derived from the chip (48 MiB on 64 MiB v7x, ~96 MiB on 128 MiB v5e/v6e)."""
    cap = None
    try:
        info = pltpu.get_tpu_info()
        cap = getattr(info, "vmem_capacity_bytes", None)
    except Exception:
        cap = None
    if not cap:
        cap = 64 * 1024 * 1024  # conservative: v7x physical VMEM per TensorCore
    return max(16 * 1024 * 1024, min((cap * 3) // 4, 100 * 1024 * 1024))


def _choose_batch_tile(batch, input_dim, output_dim, x_bytes, w_bytes, out_bytes,
                       vmem_budget):
    """Largest power-of-two batch tile (multiple of 8) whose blocks fit the VMEM budget.

    Budget accounts for layout padding to (8,128) tiles: double-buffered x and
    out tiles, the resident (still 2x-allocated) f32 weight block, and a
    sublane-padded bias block.
    """
    if batch < 8:
        return batch  # block dim == full array dim is always legal
    i_lane = _round_up(input_dim, 128)
    o_lane = _round_up(output_dim, 128)
    i_sub = _round_up(input_dim, 8)
    w_block = 2 * i_sub * o_lane * w_bytes
    b_block = 2 * 8 * o_lane * 4
    tb = 8
    cand = 8
    cap = min(batch, 2048)
    while cand <= cap:
        need = (2 * cand * i_lane * x_bytes      # x blocks (double-buffered)
                + 2 * cand * o_lane * out_bytes  # out blocks (double-buffered)
                + w_block + b_block)
        if need <= vmem_budget:
            tb = cand
        cand *= 2
    return tb


def _fclayer_kernel(x_ref, w_ref, b_ref, o_ref):
    # x_ref: (TB, I) | w_ref: (I, O) | b_ref: (1, O) | o_ref: (TB, O)
    # Cast to bf16 inside the kernel (hidden under DMA) so HBM keeps f32 and
    # x is traversed exactly once.
    x = x_ref[...].astype(jnp.bfloat16)
    w = w_ref[...].astype(jnp.bfloat16)
    acc = jnp.dot(x, w, preferred_element_type=jnp.float32)
    acc = acc + b_ref[...].astype(jnp.float32)   # (1, O) broadcasts over rows
    o_ref[...] = (acc * jax.nn.sigmoid(acc)).astype(o_ref.dtype)   # swish


def fclayer_forward(x, weight, bias, out_dtype=None):
    """x: (E, B, I), weight: (E, I, O), bias: (E, O) -> swish(x @ w + b), (E, B, O).

    Pass out_dtype=jnp.bfloat16 to halve store-side HBM traffic when the
    consumer tolerates bf16.
    """
    E, B, I = x.shape
    _, _, O = weight.shape
    out_dtype = x.dtype if out_dtype is None else out_dtype

    vmem_limit = _vmem_limit_bytes()
    TB = _choose_batch_tile(
        B, I, O,
        x_bytes=jnp.dtype(x.dtype).itemsize,
        w_bytes=jnp.dtype(weight.dtype).itemsize,
        out_bytes=jnp.dtype(out_dtype).itemsize,
        vmem_budget=(vmem_limit * 4) // 5,   # headroom for the compiler
    )

    # Bias as a (E, 1, O) view so the kernel gets a clean 2-D broadcastable tile
    # (cheap metadata-level reshape; no HBM pass over x / weight / out anywhere).
    b3 = bias.reshape(E, 1, O)

    grid = (E, pl.cdiv(B, TB))   # ensemble outer, batch-tile inner (weight stays resident)

    # Steer the megacore split onto the ensemble axis when possible so each
    # TensorCore keeps a distinct weight slab resident; fall back to batch
    # parallelism for E == 1.
    if E >= 2:
        dims = ("parallel", "arbitrary")
    else:
        dims = ("arbitrary", "parallel")

    cost = pl.CostEstimate(
        flops=2 * E * B * I * O,
        transcendentals=E * B * O,
        bytes_accessed=(x.size * jnp.dtype(x.dtype).itemsize
                        + weight.size * jnp.dtype(weight.dtype).itemsize
                        + bias.size * jnp.dtype(bias.dtype).itemsize
                        + E * B * O * jnp.dtype(out_dtype).itemsize),
    )

    out = pl.pallas_call(
        _fclayer_kernel,
        out_shape=jax.ShapeDtypeStruct((E, B, O), out_dtype),
        grid_spec=pltpu.PrefetchScalarGridSpec(
            num_scalar_prefetch=0,
            grid=grid,
            in_specs=[
                # Leading ensemble dim squeezed (None) -> 2-D (sublane, lane) refs.
                # Last dims equal the full array dims, so no padding is required
                # and no wrapper pad/slice passes are needed.
                pl.BlockSpec((None, TB, I), lambda e, b: (e, b, 0)),
                # Weight block index constant along the inner batch axis: Pallas
                # skips the re-DMA, holding the (I, O) slab in VMEM per member.
                pl.BlockSpec((None, I, O), lambda e, b: (e, 0, 0)),
                pl.BlockSpec((None, 1, O), lambda e, b: (e, 0, 0)),
            ],
            out_specs=pl.BlockSpec((None, TB, O), lambda e, b: (e, b, 0)),
        ),
        compiler_params=pltpu.CompilerParams(
            dimension_semantics=dims,
            vmem_limit_bytes=vmem_limit,
        ),
        cost_estimate=cost,
    )(x, weight, b3)

    return out


def reference_forward_bf16(x, weight, bias):
    """Reference matching the kernel's numerics (bf16 MXU inputs, f32 accum)."""
    acc = jnp.einsum(
        "ebi,eio->ebo",
        x.astype(jnp.bfloat16), weight.astype(jnp.bfloat16),
        preferred_element_type=jnp.float32,
    ) + bias[:, None, :].astype(jnp.float32)
    return acc * jax.nn.sigmoid(acc)


def reference_forward_f32(x, weight, bias):
    acc = jnp.einsum("ebi,eio->ebo", x, weight) + bias[:, None, :]
    return acc * jax.nn.sigmoid(acc)


if __name__ == "__main__":
    ensemble_size, batch, input_dim, output_dim = 4, 8, 32, 32

    key = jax.random.PRNGKey(0)
    kx, kw, kb = jax.random.split(key, 3)

    x = jax.random.normal(kx, (ensemble_size, batch, input_dim), dtype=jnp.float32)
    # Deterministic parameter init (truncated-normal-ish scale like MBPO init).
    weight = jax.random.normal(
        kw, (ensemble_size, input_dim, output_dim), dtype=jnp.float32
    ) / jnp.sqrt(2.0 * input_dim)
    bias = 0.01 * jax.random.normal(
        kb, (ensemble_size, output_dim), dtype=jnp.float32
    )

    out = fclayer_forward(x, weight, bias)
    out = jax.block_until_ready(out)
    assert out.shape == (ensemble_size, batch, output_dim)
    assert out.dtype == x.dtype

    # Exact-numerics check against a bf16-input / f32-accum reference.
    ref_bf16 = reference_forward_bf16(x, weight, bias)
    assert jnp.allclose(out, ref_bf16, atol=1e-3, rtol=1e-3)

    # Loose sanity check against the full-f32 reference (bf16 cast changes numerics).
    ref_f32 = reference_forward_f32(x, weight, bias)
    assert jnp.allclose(out, ref_f32, atol=5e-2, rtol=5e-2)

    print("KERNEL_OK")
</pallas_src>

<mosaic_0001>
module attributes {stable_mosaic.version = 11 : i64} {
  func.func @_fclayer_kernel(%arg0: i32, %arg1: i32, %arg2: memref<1x8x32xf32, #tpu.memory_space<vmem>>, %arg3: memref<1x32x32xf32, #tpu.memory_space<vmem>>, %arg4: memref<1x1x32xf32, #tpu.memory_space<vmem>>, %arg5: memref<1x8x32xf32, #tpu.memory_space<vmem>>) attributes {dimension_semantics = [#tpu.dimension_semantics<parallel>, #tpu.dimension_semantics<arbitrary>], iteration_bounds = array<i64: 4, 1>, scalar_prefetch = 0 : i64, scratch_operands = 0 : i64, tpu.core_type = #tpu.core_type<tc>, window_params = [{transform_indices = @transform_0, window_bounds = array<i64: 1, 8, 32>}, {transform_indices = @transform_1, window_bounds = array<i64: 1, 32, 32>}, {transform_indices = @transform_2, window_bounds = array<i64: 1, 1, 32>}, {transform_indices = @transform_3, window_bounds = array<i64: 1, 8, 32>}]} {
    %c0 = arith.constant 0 : index
    %c0_0 = arith.constant 0 : index
    %c0_1 = arith.constant 0 : index
    %0 = vector.load %arg2[%c0, %c0_0, %c0_1] : memref<1x8x32xf32, #tpu.memory_space<vmem>>, vector<1x8x32xf32>
    %1 = vector.shape_cast %0 : vector<1x8x32xf32> to vector<8x32xf32>
    %2 = arith.truncf %1 : vector<8x32xf32> to vector<8x32xbf16>
    %c0_2 = arith.constant 0 : index
    %c0_3 = arith.constant 0 : index
    %c0_4 = arith.constant 0 : index
    %3 = vector.load %arg3[%c0_2, %c0_3, %c0_4] : memref<1x32x32xf32, #tpu.memory_space<vmem>>, vector<1x32x32xf32>
    %4 = vector.shape_cast %3 : vector<1x32x32xf32> to vector<32x32xf32>
    %5 = arith.truncf %4 : vector<32x32xf32> to vector<32x32xbf16>
    %cst = arith.constant dense<0.000000e+00> : vector<8x32xf32>
    %6 = tpu.matmul %2, %5, %cst {dimension_numbers = #tpu.dot_dimension_numbers<[1], [0], [0], [1], [0, 0, 1, 1], [], []>} : vector<8x32xbf16>, vector<32x32xbf16>, vector<8x32xf32> -> vector<8x32xf32>
    %c0_5 = arith.constant 0 : index
    %c0_6 = arith.constant 0 : index
    %c0_7 = arith.constant 0 : index
    %7 = vector.load %arg4[%c0_5, %c0_6, %c0_7] : memref<1x1x32xf32, #tpu.memory_space<vmem>>, vector<1x1x32xf32>
    %8 = vector.shape_cast %7 : vector<1x1x32xf32> to vector<1x32xf32>
    %9 = vector.broadcast %8 : vector<1x32xf32> to vector<8x32xf32>
    %10 = arith.addf %6, %9 : vector<8x32xf32>
    %11 = arith.negf %10 : vector<8x32xf32>
    %12 = math.exp %11 : vector<8x32xf32>
    %cst_8 = arith.constant 1.000000e+00 : f32
    %13 = vector.broadcast %cst_8 : f32 to vector<8x32xf32>
    %14 = arith.addf %13, %12 : vector<8x32xf32>
    %15 = arith.divf %13, %14 : vector<8x32xf32>
    %16 = arith.mulf %10, %15 : vector<8x32xf32>
    %c0_9 = arith.constant 0 : index
    %c0_10 = arith.constant 0 : index
    %c0_11 = arith.constant 0 : index
    %17 = vector.load %arg5[%c0_9, %c0_10, %c0_11] : memref<1x8x32xf32, #tpu.memory_space<vmem>>, vector<1x8x32xf32>
    %18 = vector.shape_cast %17 : vector<1x8x32xf32> to vector<8x32xf32>
    %19 = vector.shape_cast %16 : vector<8x32xf32> to vector<1x8x32xf32>
    tpu.vector_store %arg5[%c0_9, %c0_10, %c0_11], %19 {strides = array<i32>} : memref<1x8x32xf32, #tpu.memory_space<vmem>>, vector<1x8x32xf32>,
    return
  }
  func.func @transform_0(%arg0: i32, %arg1: i32) -> (i32, i32, i32) {
    %c0_i32 = arith.constant 0 : i32
    %c0_i32_0 = arith.constant 0 : i32
    return %arg0, %arg1, %c0_i32 : i32, i32, i32
  }
  func.func @transform_1(%arg0: i32, %arg1: i32) -> (i32, i32, i32) {
    %c0_i32 = arith.constant 0 : i32
    %c0_i32_0 = arith.constant 0 : i32
    %c0_i32_1 = arith.constant 0 : i32
    return %arg0, %c0_i32, %c0_i32_0 : i32, i32, i32
  }
  func.func @transform_2(%arg0: i32, %arg1: i32) -> (i32, i32, i32) {
    %c0_i32 = arith.constant 0 : i32
    %c0_i32_0 = arith.constant 0 : i32
    %c0_i32_1 = arith.constant 0 : i32
    return %arg0, %c0_i32, %c0_i32_0 : i32, i32, i32
  }
  func.func @transform_3(%arg0: i32, %arg1: i32) -> (i32, i32, i32) {
    %c0_i32 = arith.constant 0 : i32
    %c0_i32_0 = arith.constant 0 : i32
    return %arg0, %arg1, %c0_i32 : i32, i32, i32
  }
}

</mosaic_0001>

<llo_original>
// kernel: tpu_custom_call.1
$region0: #{tpu_custom_call.1}
  #allocation0 [shape = 'u32[]', space=smem, size = 0x4, offset = 0x4, fixed_abs, tag = 'smem constant byte address 0x4 - core index']
  #allocation1 [shape = 'u32[144,128]{1,0:T(1,128)}', space=vmem, size = 0x12000, scoped, tag = 'internal scratch']
  %s0 = inlined_call_operand.hbm [shape: f32[4,8,32], index: 0, kind: input, shape index: {}]
  %s1 = inlined_call_operand.hbm [shape: f32[4,32,32], index: 1, kind: input, shape index: {}]
  %s2 = inlined_call_operand.vmem [shape: f32[4,1,32], index: 2, kind: input, shape index: {}]
  %s3 = inlined_call_operand.hbm [shape: f32[4,8,32], index: 3, kind: output, shape index: {}]
  %s4 = sld [smem:[#allocation0]]
  $region53: #{tpu_custom_call.1} parent=0
    _
  %s6 = ssub.s32 1, %s4
  %s7 = scalar_select 0, %s6, %s4
  $region1: #{tpu_custom_call.1} parent=0
    #allocation2 [shape = 'u8[8192]{0}', space=vmem, size = 0x2000, scoped, tag = 'input window, operand 0']
    #allocation3 [shape = 's32[2]{0}', space=sflag, size = 0x8, scoped, tag = 'scoped memory for tpu_custom_call.1']
    #allocation4 [shape = 's32[2]{0}', space=sflag, size = 0x8, scoped, tag = 'scoped memory for tpu_custom_call.1']
    #allocation5 [shape = 'u8[32768]{0}', space=vmem, size = 0x8000, scoped, tag = 'input window, operand 1']
    #allocation6 [shape = 's32[2]{0}', space=sflag, size = 0x8, scoped, tag = 'scoped memory for tpu_custom_call.1']
    #allocation7 [shape = 'u8[8192]{0}', space=vmem, size = 0x2000, scoped, tag = 'output window, operand 0']
    %8 = vsyncpa [#allocation3], 0
    %s9 = scalar_lea.sflag [#allocation3], 1
    %10 = vsyncpa %s9, 0
    %11 = vsyncpa [#allocation6], 0
    %s12 = scalar_lea.sflag [#allocation6], 1
    %13 = vsyncpa %s12, 0
    %14 = vsyncpa [#allocation4], 0
    %s15 = scalar_lea.sflag [#allocation4], 1
    %16 = vsyncpa %s15, 0
    loop: start=0, step=1, limit=6
    $region2: #{tpu_custom_call.1} parent=1 // loop_pre_header
      _
    $region3: #{tpu_custom_call.1} parent=1 // loop_header
      %s18 = sphi 0, %s22
      %p19 = scmp.ge.s32.totalorder %s18, 6
      %s25 = sphi 0, %s37
      %s26 = sphi 0, %s33
      %s27 = sphi 0, %s25
      %s28 = sphi 0, %s26
      %s29 = sphi 0, %s27
      %s30 = sphi 0, %s28
      %s42 = sphi 0, %s44
      %s45 = sphi 0, %s42
      %s46 = sphi 0, %s45
      %s62 = sphi 0, %s46
      %s68 = sphi 0, %s70
      %s71 = sphi 0, %s68
      %s72 = sphi 0, %s71
      %s88 = sphi 0, %s72
      %s94 = sphi 0, %s96
      %s97 = sphi 0, %s94
      %s98 = sphi 0, %s97
      %s114 = sphi 0, %s98
      %s122 = sphi 0, %s124
      %s125 = sphi 0, %s122
      %s126 = sphi 0, %s125
      %s142 = sphi 0, %s126
    $region4: #{tpu_custom_call.1} parent=1 // loop_header_branch
      %21 = sbr.rel (%p19) target = $region8
    $region5: #{tpu_custom_call.1} parent=1 // loop_body
      %s23 = ssub.s32 %s18, 1
      %s24 = ssub.s32 %s18, 2
      %s31 = sadd.s32 1, %s26
      %p32 = scmp.ge.s32.totalorder %s31, 1
      %s33 = scalar_select %p32, 0, %s31
      %s34 = sadd.s32 1, %s25
      %s35 = scalar_select %p32, %s34, %s25
      %p36 = scmp.ge.s32.totalorder %s35, 4
      %s37 = scalar_select %p36, 0, %s35
      %s38 = ssub.s32 %s25, %s37
      %s39 = ssub.s32 %s26, %s33
      %s40 = sor.u32 %s38, %s39
      %p41 = scmp.eq.s32.totalorder %s40, 0
      %s43 = sadd.s32 %s42, 1
      %s44 = scalar_select %p41, %s42, %s43
      %p47 = pneg %p41
      %p48 = scmp.eq.s32.totalorder %s18, 3
      %p49 = por %p47, %p48
      %p50 = scmp.ne.s32.totalorder %s42, %s45
      %p51 = scmp.eq.s32.totalorder %s18, 0
      %p52 = por %p50, %p51
      %p53 = scmp.ne.s32.totalorder %s42, %s45
      %p54 = scmp.eq.s32.totalorder %s23, 3
      %p55 = por %p53, %p54
      %p56 = scmp.ne.s32.totalorder %s45, %s46
      %p57 = scmp.eq.s32.totalorder %s23, 0
      %p58 = por %p56, %p57
      %p59 = scmp.ne.s32.totalorder %s45, %s46
      %p60 = scmp.eq.s32.totalorder %s24, 3
      %p61 = por %p59, %p60
      %p63 = scmp.ne.s32.totalorder %s46, %s62
      %p64 = scmp.eq.s32.totalorder %s24, 0
      %p65 = por %p63, %p64
      %s66 = ssub.s32 %s25, %s37
      %p67 = scmp.eq.s32.totalorder %s66, 0
      %s69 = sadd.s32 %s68, 1
      %s70 = scalar_select %p67, %s68, %s69
      %p73 = pneg %p67
      %p74 = scmp.eq.s32.totalorder %s18, 3
      %p75 = por %p73, %p74
      %p76 = scmp.ne.s32.totalorder %s68, %s71
      %p77 = scmp.eq.s32.totalorder %s18, 0
      %p78 = por %p76, %p77
      %p79 = scmp.ne.s32.totalorder %s68, %s71
      %p80 = scmp.eq.s32.totalorder %s23, 3
      %p81 = por %p79, %p80
      %p82 = scmp.ne.s32.totalorder %s71, %s72
      %p83 = scmp.eq.s32.totalorder %s23, 0
      %p84 = por %p82, %p83
      %p85 = scmp.ne.s32.totalorder %s71, %s72
      %p86 = scmp.eq.s32.totalorder %s24, 3
      %p87 = por %p85, %p86
      %p89 = scmp.ne.s32.totalorder %s72, %s88
      %p90 = scmp.eq.s32.totalorder %s24, 0
      %p91 = por %p89, %p90
      %s92 = ssub.s32 %s25, %s37
      %p93 = scmp.eq.s32.totalorder %s92, 0
      %s95 = sadd.s32 %s94, 1
      %s96 = scalar_select %p93, %s94, %s95
      %p99 = pneg %p93
      %p100 = scmp.eq.s32.totalorder %s18, 3
      %p101 = por %p99, %p100
      %p102 = scmp.ne.s32.totalorder %s94, %s97
      %p103 = scmp.eq.s32.totalorder %s18, 0
      %p104 = por %p102, %p103
      %p105 = scmp.ne.s32.totalorder %s94, %s97
      %p106 = scmp.eq.s32.totalorder %s23, 3
      %p107 = por %p105, %p106
      %p108 = scmp.ne.s32.totalorder %s97, %s98
      %p109 = scmp.eq.s32.totalorder %s23, 0
      %p110 = por %p108, %p109
      %p111 = scmp.ne.s32.totalorder %s97, %s98
      %p112 = scmp.eq.s32.totalorder %s24, 3
      %p113 = por %p111, %p112
      %p115 = scmp.ne.s32.totalorder %s98, %s114
      %p116 = scmp.eq.s32.totalorder %s24, 0
      %p117 = por %p115, %p116
      %s118 = ssub.s32 %s25, %s37
      %s119 = ssub.s32 %s26, %s33
      %s120 = sor.u32 %s118, %s119
      %p121 = scmp.eq.s32.totalorder %s120, 0
      %s123 = sadd.s32 %s122, 1
      %s124 = scalar_select %p121, %s122, %s123
      %p127 = pneg %p121
      %p128 = scmp.eq.s32.totalorder %s18, 3
      %p129 = por %p127, %p128
      %p130 = scmp.ne.s32.totalorder %s122, %s125
      %p131 = scmp.eq.s32.totalorder %s18, 0
      %p132 = por %p130, %p131
      %p133 = scmp.ne.s32.totalorder %s122, %s125
      %p134 = scmp.eq.s32.totalorder %s23, 3
      %p135 = por %p133, %p134
      %p136 = scmp.ne.s32.totalorder %s125, %s126
      %p137 = scmp.eq.s32.totalorder %s23, 0
      %p138 = por %p136, %p137
      %p139 = scmp.ne.s32.totalorder %s125, %s126
      %p140 = scmp.eq.s32.totalorder %s24, 3
      %p141 = por %p139, %p140
      %p143 = scmp.ne.s32.totalorder %s126, %s142
      %p144 = scmp.eq.s32.totalorder %s24, 0
      %p145 = por %p143, %p144
      %p146 = scmp.le.s32.totalorder 1, %s18
      %p147 = scmp.lt.s32.totalorder %s18, 5
      %p148 = pnand %p146, %p147
      %p149 = pneg %p148
      // Predicated region
      $region9: #{tpu_custom_call.1} parent=5 // pred_check
        _
      $region10: #{tpu_custom_call.1} parent=5 // pred_check_branch
        %151 = sbr.rel (%p148) target = $region12
      $region11: #{tpu_custom_call.1} parent=5 // pred_region
        %s152 = ssub.s32 %s18, 1
      $region12: #{tpu_custom_call.1} parent=5 // pred_fallthru
        _
      %p153 = scmp.lt.s32.totalorder %s18, 4
      // Predicated region
      $region13: #{tpu_custom_call.1} parent=5 // pred_check
        %p154 = pneg %p153
      $region14: #{tpu_custom_call.1} parent=5 // pred_check_branch
        %156 = sbr.rel (%p154) target = $region16
      $region15: #{tpu_custom_call.1} parent=5 // pred_region
        // Predicated region
        $region17: #{tpu_custom_call.1} parent=15 // pred_check
          %p157 = pneg %p52
        $region18: #{tpu_custom_call.1} parent=15 // pred_check_branch
          %159 = sbr.rel (%p157) target = $region20
        $region19: #{tpu_custom_call.1} parent=15 // pred_region
          %s160 = sand.u32 %s42, 1
          %s161 = scalar_lea.sflag [#allocation3], %s160
          %s162 = sand.u32 %s42, 1
          %s163 = smul.addr %s162, 8
          %s164 = scalar_lea.vmem [#allocation2], %s163
          %s166 = ssub.s32 128, 128
          %167 = vsyncadd %s161, %s166
          %s168 = sadd.s32 %s26, %s25
          %s169 = smul.addr %s168, 128
          %s170 = scalar_lea.hbm %s0, %s169
          %s172 = sshll.u32 %s164, 4
          %s173 = int_to_ptr.vmem [resolvable:$true] %s172
          %175 = dma.hbm_to_vmem [thread:$0]  %s170, 128, %s173, %s161
        $region20: #{tpu_custom_call.1} parent=15 // pred_fallthru
          _
        // Predicated region
        $region21: #{tpu_custom_call.1} parent=15 // pred_check
          %p176 = pneg %p78
        $region22: #{tpu_custom_call.1} parent=15 // pred_check_branch
          %178 = sbr.rel (%p176) target = $region24
        $region23: #{tpu_custom_call.1} parent=15 // pred_region
          %s179 = sand.u32 %s68, 1
          %s180 = scalar_lea.sflag [#allocation6], %s179
          %s181 = sand.u32 %s68, 1
          %s182 = smul.addr %s181, 32
          %s183 = scalar_lea.vmem [#allocation5], %s182
          %s185 = ssub.s32 512, 512
          %186 = vsyncadd %s180, %s185
          %s187 = smul.addr %s25, 4
          %s188 = smul.addr %s187, 128
          %s189 = scalar_lea.hbm %s1, %s188
          %s190 = sshll.u32 %s183, 4
          %s191 = int_to_ptr.vmem [resolvable:$true] %s190
          %196 = dma.hbm_to_vmem [thread:$0]  %s189, 512, %s191, %s180, 128, 128, 8
        $region24: #{tpu_custom_call.1} parent=15 // pred_fallthru
          _
        // Predicated region
        $region25: #{tpu_custom_call.1} parent=15 // pred_check
          %p197 = pneg %p104
        $region26: #{tpu_custom_call.1} parent=15 // pred_check_branch
          %199 = sbr.rel (%p197) target = $region28
        $region27: #{tpu_custom_call.1} parent=15 // pred_region
          %p200 = scmp.lt.s32.totalorder %s25, 3
          %s201 = scalar_select %p200, %s25, 3
          %s202 = scalar_lea.vmem %s2, %s201
        $region28: #{tpu_custom_call.1} parent=15 // pred_fallthru
          _
      $region16: #{tpu_custom_call.1} parent=5 // pred_fallthru
        _
      %p203 = scmp.le.s32.totalorder 1, %s18
      %p204 = scmp.lt.s32.totalorder %s18, 5
      %p205 = pnand %p203, %p204
      %p206 = pneg %p205
      // Predicated region
      $region29: #{tpu_custom_call.1} parent=5 // pred_check
        _
      $region30: #{tpu_custom_call.1} parent=5 // pred_check_branch
        %208 = sbr.rel (%p205) target = $region32
      $region31: #{tpu_custom_call.1} parent=5 // pred_region
        %s209 = ssub.s32 %s18, 1
        %s210 = sand.u32 %s45, 1
        %s211 = scalar_lea.sflag [#allocation3], %s210
        %s212 = sand.u32 %s45, 1
        %s213 = smul.addr %s212, 8
        %s214 = scalar_lea.vmem [#allocation2], %s213
        // Predicated region
        $region33: #{tpu_custom_call.1} parent=31 // pred_check
          %p215 = pneg %p58
        $region34: #{tpu_custom_call.1} parent=31 // pred_check_branch
          %217 = sbr.rel (%p215) target = $region36
        $region35: #{tpu_custom_call.1} parent=31 // pred_region
          %218 = dma.done %s211, 128
        $region36: #{tpu_custom_call.1} parent=31 // pred_fallthru
          _
        %s219 = sand.u32 %s71, 1
        %s220 = scalar_lea.sflag [#allocation6], %s219
        %s221 = sand.u32 %s71, 1
        %s222 = smul.addr %s221, 32
        %s223 = scalar_lea.vmem [#allocation5], %s222
        // Predicated region
        $region37: #{tpu_custom_call.1} parent=31 // pred_check
          %p224 = pneg %p84
        $region38: #{tpu_custom_call.1} parent=31 // pred_check_branch
          %226 = sbr.rel (%p224) target = $region40
        $region39: #{tpu_custom_call.1} parent=31 // pred_region
          %227 = dma.done %s220, 512
        $region40: #{tpu_custom_call.1} parent=31 // pred_fallthru
          _
        %s228 = sand.u32 %s45, 1
        %s229 = scalar_lea.sflag [#allocation3], %s228
        %s230 = sand.u32 %s45, 1
        %s231 = smul.addr %s230, 8
        %s232 = scalar_lea.vmem [#allocation2], %s231
        %p233 = pneg %p58
        %p234 = pneg %p55
        %s235 = sand.u32 %s71, 1
        %s236 = scalar_lea.sflag [#allocation6], %s235
        %s237 = sand.u32 %s71, 1
        %s238 = smul.addr %s237, 32
        %s239 = scalar_lea.vmem [#allocation5], %s238
        %p240 = pneg %p84
        %p241 = pneg %p81
        %p242 = scmp.lt.s32.totalorder %s27, 3
        %s243 = scalar_select %p242, %s27, 3
        %s244 = scalar_lea.vmem %s2, %s243
        %p245 = pneg %p110
        %p246 = pneg %p107
        %p247 = pneg %p138
        %p248 = pneg %p135
        %s249 = sand.u32 %s125, 1
        %s250 = scalar_lea.sflag [#allocation4], %s249
        %s251 = sand.u32 %s125, 1
        %s252 = smul.addr %s251, 8
        %s253 = scalar_lea.vmem [#allocation7], %s252
        %p254 = scmp.lt.s32.totalorder %s27, 3
        %s255 = scalar_select %p254, %s27, 3
        %s256 = scalar_lea.vmem %s2, %s255
        %v258 = vld [vmem:[%s214] sm:$0xff]
        %v259 = vpack.c.bf16 %v258, %v258
        %v260 = vld [vmem:[%s223] sm:$0xff]
        %v261 = vld [vmem:[%s223 + $0x8] sm:$0xff]
        %v262 = vld [vmem:[%s223 + $0x10] sm:$0xff]
        %v263 = vld [vmem:[%s223 + $0x18] sm:$0xff]
        %v264 = vpack.c.bf16 %v261, %v260
        %v265 = vpack.c.bf16 %v263, %v262
        %v266 = vld [vmem:[%s256] sm:$0x1]
        %v268 = vlaneseq
        %v269 = vshrl.u32 %v268, 7
        %v270 = vsub.s32 0, %v269
        %v271 = vrot.slane %v266, %v270
        %vm273 = vcmask 261120
        %v275 = vsel %vm273, %v259, 0
        %277 = vmatprep.subr.bf16.mxu0 0
        %278 = vmatpush1.bf16.msra.mxu0 %v264
        %279 = vmatprep.subr.bf16.mxu0 0
        %280 = vmatpush1.bf16.msra.mxu0 %v265
        %281 = vmatprep.subr.bf16.mxu0 0
        %282 = vmatpush1.bf16.msra.mxu0 0
        %283 = vmatprep.subr.bf16.mxu0 0
        %284 = vmatpush1.bf16.msra.mxu0 0
        %285 = vmatprep.subr.bf16.mxu0 0
        %286 = vmatpush1.bf16.msra.mxu0 0
        %287 = vmatprep.subr.bf16.mxu0 0
        %288 = vmatpush1.bf16.msra.mxu0 0
        %289 = vmatprep.subr.bf16.mxu0 0
        %290 = vmatpush1.bf16.msra.mxu0 0
        %291 = vmatprep.subr.bf16.mxu0 0
        %292 = vmatpush1.bf16.msra.mxu0 0
        %293 = vmatprep.subr.bf16.mxu0 0
        %294 = vmatpush1.bf16.msra.mxu0 0
        %295 = vmatprep.subr.bf16.mxu0 0
        %296 = vmatpush1.bf16.msra.mxu0 0
        %297 = vmatprep.subr.bf16.mxu0 0
        %298 = vmatpush1.bf16.msra.mxu0 0
        %299 = vmatprep.subr.bf16.mxu0 0
        %300 = vmatpush1.bf16.msra.mxu0 0
        %301 = vmatprep.subr.bf16.mxu0 0
        %302 = vmatpush1.bf16.msra.mxu0 0
        %303 = vmatprep.subr.bf16.mxu0 0
        %304 = vmatpush1.bf16.msra.mxu0 0
        %305 = vmatprep.subr.bf16.mxu0 0
        %306 = vmatpush1.bf16.msra.mxu0 0
        %307 = vmatprep.subr.bf16.mxu0 0
        %308 = vmatpush1.bf16.msra.mxu0 0
        %309 = vmatprep.mubr.bf16.mxu0 0
        %310 = vmatmul.mubr.bf16.gmra.mrb[0].mxu0 %v275
        %v311 = vpop.f32.mrb[0].mxu0
        %v312 = vadd.f32 %v271, %v311
        %v313 = vpop.f32.mrb[0].mxu0
        %v314 = vpop.f32.mrb[0].mxu0
        %v315 = vpop.f32.mrb[0].mxu0
        %316 = vdwg.mxu0
        %v317 = vxor.u32 %v312, 2147483648
        %v318 = vmul.f32 %v317, 1.442695
        %v319 = vpow.pop %v318
        %v320 = vadd.f32 %v319, 1.0
        %v321 = vrcp.pop %v320
        %v322 = vmul.f32 1.0, %v321
        %v323 = vmul.f32 %v312, %v322
        %324 = vst.msk [vmem:[%s253] sm:$0xff] %vm273, %v323
        %s325 = sand.u32 %s125, 1
        %s326 = scalar_lea.sflag [#allocation4], %s325
        %s327 = sand.u32 %s125, 1
        %s328 = smul.addr %s327, 8
        %s329 = scalar_lea.vmem [#allocation7], %s328
        // Predicated region
        $region41: #{tpu_custom_call.1} parent=31 // pred_check
          %p330 = pneg %p135
        $region42: #{tpu_custom_call.1} parent=31 // pred_check_branch
          %332 = sbr.rel (%p330) target = $region44
        $region43: #{tpu_custom_call.1} parent=31 // pred_region
          %s334 = ssub.s32 128, 128
          %335 = vsyncadd %s326, %s334
          %s336 = sadd.s32 %s28, %s27
          %s337 = smul.addr %s336, 128
          %s338 = scalar_lea.hbm %s3, %s337
          %s340 = sshll.u32 %s329, 4
          %s341 = int_to_ptr.vmem [resolvable:$true] %s340
          %343 = dma.vmem_to_hbm [thread:$0]  %s341, 128, %s338, %s326
        $region44: #{tpu_custom_call.1} parent=31 // pred_fallthru
          _
      $region32: #{tpu_custom_call.1} parent=5 // pred_fallthru
        _
      %p344 = scmp.le.s32.totalorder 2, %s18
      // Predicated region
      $region45: #{tpu_custom_call.1} parent=5 // pred_check
        %p345 = pneg %p344
      $region46: #{tpu_custom_call.1} parent=5 // pred_check_branch
        %347 = sbr.rel (%p345) target = $region48
      $region47: #{tpu_custom_call.1} parent=5 // pred_region
        %s348 = ssub.s32 %s18, 2
        // Predicated region
        $region49: #{tpu_custom_call.1} parent=47 // pred_check
          %p349 = pneg %p141
        $region50: #{tpu_custom_call.1} parent=47 // pred_check_branch
          %351 = sbr.rel (%p349) target = $region52
        $region51: #{tpu_custom_call.1} parent=47 // pred_region
          %s352 = sand.u32 %s126, 1
          %s353 = scalar_lea.sflag [#allocation4], %s352
          %s354 = sand.u32 %s126, 1
          %s355 = smul.addr %s354, 8
          %s356 = scalar_lea.vmem [#allocation7], %s355
          %357 = dma.done %s353, 128
        $region52: #{tpu_custom_call.1} parent=47 // pred_fallthru
          _
      $region48: #{tpu_custom_call.1} parent=5 // pred_fallthru
        _
    $region6: #{tpu_custom_call.1} parent=1 // loop_footer
      %s22 = sadd.s32 1, %s18
    $region7: #{tpu_custom_call.1} parent=1 // loop_footer_branch
      %17 = sbr.rel target = $region3
    $region8: #{tpu_custom_call.1} parent=1 // loop_exit
      _
    %358 = vsyncpa [#allocation3], 1
    %s359 = scalar_lea.sflag [#allocation3], 1
    %360 = vsyncpa %s359, 1
    %361 = vsyncpa [#allocation6], 1
    %s362 = scalar_lea.sflag [#allocation6], 1
    %363 = vsyncpa %s362, 1
    %364 = vsyncpa [#allocation4], 1
    %s365 = scalar_lea.sflag [#allocation4], 1
    %366 = vsyncpa %s365, 1

</llo_original>
